<compile_context>
chip_gen: v6e
topology: v6e:2x2x1
jax: 0.10.0
libtpu: 0.0.40
codegen_flags: <defaults>
</compile_context>

<pallas_src>
import jax
import jax.numpy as jnp
from jax.experimental import pallas as pl
from jax.experimental.pallas import tpu as pltpu


def _pos_embed_kernel(pe_ref, x_ref, o_ref):
    # pe_ref: (N, D)      -- sinusoidal table slice, identical for every batch tile
    # x_ref : (Bt, N, D)  -- Bt batch elements' tokens
    # o_ref : (Bt, N, D)
    o_ref[...] = x_ref[...] + pe_ref[...][None, :, :]


def make_sinusoidal_pe(max_patch_num: int, D: int, dtype=jnp.float32) -> jax.Array:
    """Vectorized equivalent of the module's double python loop."""
    p = jnp.arange(max_patch_num, dtype=jnp.float32)[:, None]          # (P, 1)
    idx = jnp.arange(D)[None, :]                                       # (1, D)
    i_f = idx.astype(jnp.float32)
    even_exponent = jnp.where(idx % 2 == 0, i_f, i_f - 1.0) / float(D)  # i or (i-1), /D
    angle = p / jnp.power(10000.0, even_exponent)                       # (P, D)
    pe = jnp.where(idx % 2 == 0, jnp.sin(angle), jnp.cos(angle))
    return pe.astype(dtype)                                             # (P, D)


def _choose_batch_tile(B: int, N: int, D: int, itemsize: int,
                       target_bytes: int = 1 << 20) -> int:
    """Pick Bt so each tile is ~target_bytes, divides B, and leaves >=2 grid steps."""
    per_batch = max(1, N * D * itemsize)
    bt = max(1, min(B, target_bytes // per_batch))
    if B >= 2:
        bt = min(bt, max(1, B // 2))   # keep at least 2 parallel steps (v7x megacore)
    while B % bt:                      # exact tiling -> no partial blocks
        bt -= 1
    return bt


def positional_embeddings(x: jax.Array, pe: jax.Array) -> jax.Array:
    """x: (B, N, D), pe: (max_patch_num, D) -> x + pe[:N] broadcast over batch."""
    B, N, D = x.shape
    pe_n = pe[:N, :].astype(x.dtype)                 # glue slice/cast in plain JAX
    bt = _choose_batch_tile(B, N, D, jnp.dtype(x.dtype).itemsize)
    grid = (B // bt,)

    return pl.pallas_call(
        _pos_embed_kernel,
        out_shape=jax.ShapeDtypeStruct((B, N, D), x.dtype),
        grid_spec=pltpu.PrefetchScalarGridSpec(
            num_scalar_prefetch=0,
            grid=grid,
            in_specs=[
                # Constant block index -> PE tile stays resident, DMA'd once.
                pl.BlockSpec((N, D), lambda b: (0, 0)),
                pl.BlockSpec((bt, N, D), lambda b: (b, 0, 0)),
            ],
            out_specs=pl.BlockSpec((bt, N, D), lambda b: (b, 0, 0)),
        ),
        compiler_params=pltpu.CompilerParams(
            dimension_semantics=("parallel",),
        ),
    )(pe_n, x)


if __name__ == "__main__":
    key = jax.random.PRNGKey(0)

    # Small shapes consistent with the module's forward: (batch, seq, hidden).
    B, N, D = 2, 8, 32
    max_patch_num = 14 ** 2  # module default

    pe = make_sinusoidal_pe(max_patch_num, D, dtype=jnp.float32)   # buffer PE
    x = jax.random.normal(key, (B, N, D), dtype=jnp.float32)

    out = jax.block_until_ready(positional_embeddings(x, pe))

    # Reference: plain-JAX semantics of the PyTorch forward.
    ref = x + pe[None, :N, :]
    assert out.shape == (B, N, D)
    assert jnp.allclose(out, ref, atol=1e-6), "mismatch vs reference"

    print("KERNEL_OK")
</pallas_src>

<mosaic_0001>
module attributes {stable_mosaic.version = 11 : i64} {
  func.func @_pos_embed_kernel(%arg0: i32, %arg1: memref<8x32xf32, #tpu.memory_space<vmem>>, %arg2: memref<1x8x32xf32, #tpu.memory_space<vmem>>, %arg3: memref<1x8x32xf32, #tpu.memory_space<vmem>>) attributes {dimension_semantics = [#tpu.dimension_semantics<parallel>], iteration_bounds = array<i64: 2>, scalar_prefetch = 0 : i64, scratch_operands = 0 : i64, tpu.core_type = #tpu.core_type<tc>, window_params = [{pipeline_mode = #tpu.pipeline_mode<synchronous>, transform_indices = @transform_0, window_bounds = array<i64: 8, 32>}, {transform_indices = @transform_1, window_bounds = array<i64: 1, 8, 32>}, {transform_indices = @transform_2, window_bounds = array<i64: 1, 8, 32>}]} {
    %c0 = arith.constant 0 : index
    %c0_0 = arith.constant 0 : index
    %c0_1 = arith.constant 0 : index
    %0 = vector.load %arg2[%c0, %c0_0, %c0_1] : memref<1x8x32xf32, #tpu.memory_space<vmem>>, vector<1x8x32xf32>
    %c0_2 = arith.constant 0 : index
    %c0_3 = arith.constant 0 : index
    %1 = vector.load %arg1[%c0_2, %c0_3] : memref<8x32xf32, #tpu.memory_space<vmem>>, vector<8x32xf32>
    %2 = vector.shape_cast %1 : vector<8x32xf32> to vector<1x8x32xf32>
    %3 = arith.addf %0, %2 : vector<1x8x32xf32>
    %c0_4 = arith.constant 0 : index
    %c0_5 = arith.constant 0 : index
    %c0_6 = arith.constant 0 : index
    %4 = vector.load %arg3[%c0_4, %c0_5, %c0_6] : memref<1x8x32xf32, #tpu.memory_space<vmem>>, vector<1x8x32xf32>
    tpu.vector_store %arg3[%c0_4, %c0_5, %c0_6], %3 {strides = array<i32>} : memref<1x8x32xf32, #tpu.memory_space<vmem>>, vector<1x8x32xf32>,
    return
  }
  func.func @transform_0(%arg0: i32) -> (i32, i32) {
    %c0_i32 = arith.constant 0 : i32
    %c0_i32_0 = arith.constant 0 : i32
    %c0_i32_1 = arith.constant 0 : i32
    return %c0_i32, %c0_i32_0 : i32, i32
  }
  func.func @transform_1(%arg0: i32) -> (i32, i32, i32) {
    %c0_i32 = arith.constant 0 : i32
    %c0_i32_0 = arith.constant 0 : i32
    %c0_i32_1 = arith.constant 0 : i32
    return %arg0, %c0_i32, %c0_i32_0 : i32, i32, i32
  }
  func.func @transform_2(%arg0: i32) -> (i32, i32, i32) {
    %c0_i32 = arith.constant 0 : i32
    %c0_i32_0 = arith.constant 0 : i32
    %c0_i32_1 = arith.constant 0 : i32
    return %arg0, %c0_i32, %c0_i32_0 : i32, i32, i32
  }
}

</mosaic_0001>

<llo_original>
// kernel: tpu_custom_call.1
$region0: #{tpu_custom_call.1}
  #allocation0 [shape = 'u32[]', space=smem, size = 0x4, offset = 0x4, fixed_abs, tag = 'smem constant byte address 0x4 - core index']
  #allocation1 [shape = 'u32[144,128]{1,0:T(1,128)}', space=vmem, size = 0x12000, scoped, tag = 'internal scratch']
  %s0 = inlined_call_operand.hbm [shape: f32[8,32], index: 0, kind: input, shape index: {}]
  %s1 = inlined_call_operand.hbm [shape: f32[2,8,32], index: 1, kind: input, shape index: {}]
  %s2 = inlined_call_operand.hbm [shape: f32[2,8,32], index: 2, kind: output, shape index: {}]
  %s3 = sld [smem:[#allocation0]]
  $region49: #{tpu_custom_call.1} parent=0
    _
  %s5 = ssub.s32 1, %s3
  %s6 = scalar_select 0, %s5, %s3
  $region1: #{tpu_custom_call.1} parent=0
    #allocation2 [shape = 'u8[4096]{0}', space=vmem, size = 0x1000, scoped, tag = 'input window, operand 0, single buffered']
    #allocation3 [shape = 's32[2]{0}', space=sflag, size = 0x8, scoped, tag = 'scoped memory for tpu_custom_call.1']
    #allocation4 [shape = 's32[2]{0}', space=sflag, size = 0x8, scoped, tag = 'scoped memory for tpu_custom_call.1']
    #allocation5 [shape = 'u8[8192]{0}', space=vmem, size = 0x2000, scoped, tag = 'input window, operand 1']
    #allocation6 [shape = 's32[2]{0}', space=sflag, size = 0x8, scoped, tag = 'scoped memory for tpu_custom_call.1']
    #allocation7 [shape = 'u8[8192]{0}', space=vmem, size = 0x2000, scoped, tag = 'output window, operand 0']
    %7 = vsyncpa [#allocation3], 0
    %8 = vsyncpa [#allocation6], 0
    %s9 = scalar_lea.sflag [#allocation6], 1
    %10 = vsyncpa %s9, 0
    %11 = vsyncpa [#allocation4], 0
    %s12 = scalar_lea.sflag [#allocation4], 1
    %13 = vsyncpa %s12, 0
    loop: start=0, step=1, limit=4
    $region2: #{tpu_custom_call.1} parent=1 // loop_pre_header
      _
    $region3: #{tpu_custom_call.1} parent=1 // loop_header
      %s15 = sphi 0, %s19
      %p16 = scmp.ge.s32.totalorder %s15, 4
      %s23 = sphi 0, %s23
      %s25 = sphi 0, %s23
      %s26 = sphi 0, %s25
      %s40 = sphi 0, %s26
      %s46 = sphi 0, %s48
      %s49 = sphi 0, %s46
      %s50 = sphi 0, %s49
      %s66 = sphi 0, %s50
      %s72 = sphi 0, %s74
      %s75 = sphi 0, %s72
      %s76 = sphi 0, %s75
      %s92 = sphi 0, %s76
    $region4: #{tpu_custom_call.1} parent=1 // loop_header_branch
      %18 = sbr.rel (%p16) target = $region8
    $region5: #{tpu_custom_call.1} parent=1 // loop_body
      %s20 = ssub.s32 %s15, 1
      %s21 = ssub.s32 %s15, 2
      %s22 = sadd.s32 %s15, 1
      %s24 = sadd.s32 %s23, 1
      %p27 = scmp.eq.s32.totalorder %s15, 1
      %p28 = scmp.ne.s32.totalorder %s23, %s25
      %p29 = scmp.eq.s32.totalorder %s15, 0
      %p30 = por %p28, %p29
      %p31 = scmp.ne.s32.totalorder %s23, %s25
      %p32 = scmp.eq.s32.totalorder %s20, 1
      %p33 = por %p31, %p32
      %p34 = scmp.ne.s32.totalorder %s25, %s26
      %p35 = scmp.eq.s32.totalorder %s20, 0
      %p36 = por %p34, %p35
      %p37 = scmp.ne.s32.totalorder %s25, %s26
      %p38 = scmp.eq.s32.totalorder %s21, 1
      %p39 = por %p37, %p38
      %p41 = scmp.ne.s32.totalorder %s26, %s40
      %p42 = scmp.eq.s32.totalorder %s21, 0
      %p43 = por %p41, %p42
      %s44 = ssub.s32 %s15, %s22
      %p45 = scmp.eq.s32.totalorder %s44, 0
      %s47 = sadd.s32 %s46, 1
      %s48 = scalar_select %p45, %s46, %s47
      %p51 = pneg %p45
      %p52 = scmp.eq.s32.totalorder %s15, 1
      %p53 = por %p51, %p52
      %p54 = scmp.ne.s32.totalorder %s46, %s49
      %p55 = scmp.eq.s32.totalorder %s15, 0
      %p56 = por %p54, %p55
      %p57 = scmp.ne.s32.totalorder %s46, %s49
      %p58 = scmp.eq.s32.totalorder %s20, 1
      %p59 = por %p57, %p58
      %p60 = scmp.ne.s32.totalorder %s49, %s50
      %p61 = scmp.eq.s32.totalorder %s20, 0
      %p62 = por %p60, %p61
      %p63 = scmp.ne.s32.totalorder %s49, %s50
      %p64 = scmp.eq.s32.totalorder %s21, 1
      %p65 = por %p63, %p64
      %p67 = scmp.ne.s32.totalorder %s50, %s66
      %p68 = scmp.eq.s32.totalorder %s21, 0
      %p69 = por %p67, %p68
      %s70 = ssub.s32 %s15, %s22
      %p71 = scmp.eq.s32.totalorder %s70, 0
      %s73 = sadd.s32 %s72, 1
      %s74 = scalar_select %p71, %s72, %s73
      %p77 = pneg %p71
      %p78 = scmp.eq.s32.totalorder %s15, 1
      %p79 = por %p77, %p78
      %p80 = scmp.ne.s32.totalorder %s72, %s75
      %p81 = scmp.eq.s32.totalorder %s15, 0
      %p82 = por %p80, %p81
      %p83 = scmp.ne.s32.totalorder %s72, %s75
      %p84 = scmp.eq.s32.totalorder %s20, 1
      %p85 = por %p83, %p84
      %p86 = scmp.ne.s32.totalorder %s75, %s76
      %p87 = scmp.eq.s32.totalorder %s20, 0
      %p88 = por %p86, %p87
      %p89 = scmp.ne.s32.totalorder %s75, %s76
      %p90 = scmp.eq.s32.totalorder %s21, 1
      %p91 = por %p89, %p90
      %p93 = scmp.ne.s32.totalorder %s76, %s92
      %p94 = scmp.eq.s32.totalorder %s21, 0
      %p95 = por %p93, %p94
      %p96 = scmp.le.s32.totalorder 1, %s15
      %p97 = scmp.lt.s32.totalorder %s15, 3
      %p98 = pnand %p96, %p97
      %p99 = pneg %p98
      // Predicated region
      $region9: #{tpu_custom_call.1} parent=5 // pred_check
        _
      $region10: #{tpu_custom_call.1} parent=5 // pred_check_branch
        %101 = sbr.rel (%p98) target = $region12
      $region11: #{tpu_custom_call.1} parent=5 // pred_region
        %s102 = ssub.s32 %s15, 1
        // Predicated region
        $region13: #{tpu_custom_call.1} parent=11 // pred_check
          %p103 = pneg %p36
        $region14: #{tpu_custom_call.1} parent=11 // pred_check_branch
          %105 = sbr.rel (%p103) target = $region16
        $region15: #{tpu_custom_call.1} parent=11 // pred_region
          %s107 = ssub.s32 128, 128
          %108 = vsyncadd [#allocation3], %s107
          %s110 = sshll.u32 [#allocation2], 4
          %s111 = int_to_ptr.vmem [resolvable:$true] %s110
          %113 = dma.hbm_to_vmem [thread:$0]  %s0, 128, %s111, [#allocation3]
        $region16: #{tpu_custom_call.1} parent=11 // pred_fallthru
          _
      $region12: #{tpu_custom_call.1} parent=5 // pred_fallthru
        _
      %p114 = scmp.lt.s32.totalorder %s15, 2
      // Predicated region
      $region17: #{tpu_custom_call.1} parent=5 // pred_check
        %p115 = pneg %p114
      $region18: #{tpu_custom_call.1} parent=5 // pred_check_branch
        %117 = sbr.rel (%p115) target = $region20
      $region19: #{tpu_custom_call.1} parent=5 // pred_region
        // Predicated region
        $region21: #{tpu_custom_call.1} parent=19 // pred_check
          %p118 = pneg %p56
        $region22: #{tpu_custom_call.1} parent=19 // pred_check_branch
          %120 = sbr.rel (%p118) target = $region24
        $region23: #{tpu_custom_call.1} parent=19 // pred_region
          %s121 = sand.u32 %s46, 1
          %s122 = scalar_lea.sflag [#allocation6], %s121
          %s123 = sand.u32 %s46, 1
          %s124 = smul.addr %s123, 8
          %s125 = scalar_lea.vmem [#allocation5], %s124
          %s127 = ssub.s32 128, 128
          %128 = vsyncadd %s122, %s127
          %s129 = smul.addr %s15, 128
          %s130 = scalar_lea.hbm %s1, %s129
          %s132 = sshll.u32 %s125, 4
          %s133 = int_to_ptr.vmem [resolvable:$true] %s132
          %135 = dma.hbm_to_vmem [thread:$0]  %s130, 128, %s133, %s122
        $region24: #{tpu_custom_call.1} parent=19 // pred_fallthru
          _
      $region20: #{tpu_custom_call.1} parent=5 // pred_fallthru
        _
      %p136 = scmp.le.s32.totalorder 1, %s15
      %p137 = scmp.lt.s32.totalorder %s15, 3
      %p138 = pnand %p136, %p137
      %p139 = pneg %p138
      // Predicated region
      $region25: #{tpu_custom_call.1} parent=5 // pred_check
        _
      $region26: #{tpu_custom_call.1} parent=5 // pred_check_branch
        %141 = sbr.rel (%p138) target = $region28
      $region27: #{tpu_custom_call.1} parent=5 // pred_region
        %s142 = ssub.s32 %s15, 1
        // Predicated region
        $region29: #{tpu_custom_call.1} parent=27 // pred_check
          %p143 = pneg %p36
        $region30: #{tpu_custom_call.1} parent=27 // pred_check_branch
          %145 = sbr.rel (%p143) target = $region32
        $region31: #{tpu_custom_call.1} parent=27 // pred_region
          %146 = dma.done [#allocation3], 128
        $region32: #{tpu_custom_call.1} parent=27 // pred_fallthru
          _
        %s147 = sand.u32 %s49, 1
        %s148 = scalar_lea.sflag [#allocation6], %s147
        %s149 = sand.u32 %s49, 1
        %s150 = smul.addr %s149, 8
        %s151 = scalar_lea.vmem [#allocation5], %s150
        // Predicated region
        $region33: #{tpu_custom_call.1} parent=27 // pred_check
          %p152 = pneg %p62
        $region34: #{tpu_custom_call.1} parent=27 // pred_check_branch
          %154 = sbr.rel (%p152) target = $region36
        $region35: #{tpu_custom_call.1} parent=27 // pred_region
          %155 = dma.done %s148, 128
        $region36: #{tpu_custom_call.1} parent=27 // pred_fallthru
          _
        %p156 = pneg %p36
        %p157 = pneg %p33
        %s158 = sand.u32 %s49, 1
        %s159 = scalar_lea.sflag [#allocation6], %s158
        %s160 = sand.u32 %s49, 1
        %s161 = smul.addr %s160, 8
        %s162 = scalar_lea.vmem [#allocation5], %s161
        %p163 = pneg %p62
        %p164 = pneg %p59
        %p165 = pneg %p88
        %p166 = pneg %p85
        %s167 = sand.u32 %s75, 1
        %s168 = scalar_lea.sflag [#allocation4], %s167
        %s169 = sand.u32 %s75, 1
        %s170 = smul.addr %s169, 8
        %s171 = scalar_lea.vmem [#allocation7], %s170
        %v172 = vld [vmem:[%s151] sm:$0xff]
        %v173 = vld [vmem:[#allocation2] sm:$0xff]
        %v174 = vadd.f32 %v172, %v173
        %vm175 = vcmask 261120
        %176 = vst.msk [vmem:[%s171] sm:$0xff] %vm175, %v174
        %s177 = sand.u32 %s75, 1
        %s178 = scalar_lea.sflag [#allocation4], %s177
        %s179 = sand.u32 %s75, 1
        %s180 = smul.addr %s179, 8
        %s181 = scalar_lea.vmem [#allocation7], %s180
        // Predicated region
        $region37: #{tpu_custom_call.1} parent=27 // pred_check
          %p182 = pneg %p85
        $region38: #{tpu_custom_call.1} parent=27 // pred_check_branch
          %184 = sbr.rel (%p182) target = $region40
        $region39: #{tpu_custom_call.1} parent=27 // pred_region
          %s186 = ssub.s32 128, 128
          %187 = vsyncadd %s178, %s186
          %s188 = smul.addr %s20, 128
          %s189 = scalar_lea.hbm %s2, %s188
          %s191 = sshll.u32 %s181, 4
          %s192 = int_to_ptr.vmem [resolvable:$true] %s191
          %194 = dma.vmem_to_hbm [thread:$0]  %s192, 128, %s189, %s178
        $region40: #{tpu_custom_call.1} parent=27 // pred_fallthru
          _
      $region28: #{tpu_custom_call.1} parent=5 // pred_fallthru
        _
      %p195 = scmp.le.s32.totalorder 2, %s15
      // Predicated region
      $region41: #{tpu_custom_call.1} parent=5 // pred_check
        %p196 = pneg %p195
      $region42: #{tpu_custom_call.1} parent=5 // pred_check_branch
        %198 = sbr.rel (%p196) target = $region44
      $region43: #{tpu_custom_call.1} parent=5 // pred_region
        %s199 = ssub.s32 %s15, 2
        // Predicated region
        $region45: #{tpu_custom_call.1} parent=43 // pred_check
          %p200 = pneg %p91
        $region46: #{tpu_custom_call.1} parent=43 // pred_check_branch
          %202 = sbr.rel (%p200) target = $region48
        $region47: #{tpu_custom_call.1} parent=43 // pred_region
          %s203 = sand.u32 %s76, 1
          %s204 = scalar_lea.sflag [#allocation4], %s203
          %s205 = sand.u32 %s76, 1
          %s206 = smul.addr %s205, 8
          %s207 = scalar_lea.vmem [#allocation7], %s206
          %208 = dma.done %s204, 128
        $region48: #{tpu_custom_call.1} parent=43 // pred_fallthru
          _
      $region44: #{tpu_custom_call.1} parent=5 // pred_fallthru
        _
    $region6: #{tpu_custom_call.1} parent=1 // loop_footer
      %s19 = sadd.s32 1, %s15
    $region7: #{tpu_custom_call.1} parent=1 // loop_footer_branch
      %14 = sbr.rel target = $region3
    $region8: #{tpu_custom_call.1} parent=1 // loop_exit
      _
    %209 = vsyncpa [#allocation3], 1
    %s210 = scalar_lea.sflag [#allocation3], 1
    %211 = vsyncpa %s210, 1
    %212 = vsyncpa [#allocation6], 1
    %s213 = scalar_lea.sflag [#allocation6], 1
    %214 = vsyncpa %s213, 1
    %215 = vsyncpa [#allocation4], 1
    %s216 = scalar_lea.sflag [#allocation4], 1
    %217 = vsyncpa %s216, 1

</llo_original>
